<compile_context>
chip_gen: v7x
topology: tpu7x:2x2x1
jax: 0.10.0
libtpu: 0.0.40
codegen_flags: <defaults>
</compile_context>

<pallas_src>
import functools

import jax
import jax.numpy as jnp
from jax.experimental import pallas as pl
from jax.experimental.pallas import tpu as pltpu

_LANES = 128
_PAD_LABEL = -(2 ** 31)   # sentinel: never equals a class id or ignore_index


def _dice_kernel(scalars_ref, logits_ref, labels_ref, out_ref, acc_ref, *,
                 num_classes, tile_rows, chunk_rows, acc_rows):
    """Accumulates (intersection, one_hot_sum) for one (n, split, tile) step."""
    t = pl.program_id(2)

    @pl.when(t == 0)
    def _():
        acc_ref[...] = jnp.zeros_like(acc_ref)

    tmin = scalars_ref[0]
    do_replace = scalars_ref[1] > 0
    ignore = scalars_ref[2]

    def process_chunk(off):
        labels = labels_ref[0, pl.ds(off, chunk_rows), :]
        # PyTorch-style ignore_index remap (target[target == ignore] = target.min()),
        # done in-kernel so the labels tensor is never rewritten in HBM.
        labels = jnp.where(jnp.logical_and(do_replace, labels == ignore), tmin, labels)

        def plane(c):
            return logits_ref[0, c, pl.ds(off, chunk_rows), :].astype(jnp.float32)

        # Numerically stable softmax over the class axis; classes are separate
        # vreg planes, so this is plain VPU max/add + EUP exp.
        m = plane(0)
        for c in range(1, num_classes):
            m = jnp.maximum(m, plane(c))

        denom = jnp.zeros((chunk_rows, _LANES), jnp.float32)
        e_label = jnp.zeros((chunk_rows, _LANES), jnp.float32)
        for c in range(num_classes):
            e_c = jnp.exp(plane(c) - m)
            denom = denom + e_c
            e_label = jnp.where(labels == c, e_c, e_label)   # no one-hot tensor

        inter_c = e_label * pl.reciprocal(denom, approx=False)   # softmax prob @ label
        tsum_c = jnp.logical_and(labels >= 0, labels < num_classes).astype(jnp.float32)

        if chunk_rows != acc_rows:
            # Layout-preserving fold: each (acc_rows, 128) slice is whole vregs.
            inter_c = inter_c.reshape(chunk_rows // acc_rows, acc_rows, _LANES).sum(axis=0)
            tsum_c = tsum_c.reshape(chunk_rows // acc_rows, acc_rows, _LANES).sum(axis=0)

        acc_ref[0] += inter_c
        acc_ref[1] += tsum_c

    num_chunks = tile_rows // chunk_rows
    if num_chunks == 1:
        process_chunk(0)
    else:
        @pl.loop(0, num_chunks)
        def _(ci):
            process_chunk(pl.multiple_of(ci * chunk_rows, chunk_rows))

    @pl.when(t == pl.num_programs(2) - 1)
    def _():
        # Tiny once-per-(n, split) cross-sublane reduction: (2, acc_rows, 128) -> (2, 128)
        out_ref[...] = jnp.sum(acc_ref[...], axis=1)[None, None]


def dice_loss(output, target, smooth=1.0, ignore_index=255):
    """output: (N, C, H, W) float logits (f32 or bf16); target: (N, H, W) int labels."""
    N, C, H, W = output.shape
    target = target.astype(jnp.int32)
    HW = H * W

    # Replicate PyTorch ignore_index handling; only two scalars leave XLA.
    tmin = jnp.min(target)
    tmax = jnp.max(target)
    in_range = jnp.logical_and(ignore_index >= tmin, ignore_index < tmax)  # range() excludes max
    has_ignore = jnp.any(target == ignore_index)
    do_replace = jnp.logical_and(jnp.logical_not(in_range), has_ignore)
    scalars = jnp.stack([tmin, do_replace.astype(jnp.int32),
                         jnp.asarray(ignore_index, dtype=jnp.int32)])

    itemsize = jnp.dtype(output.dtype).itemsize

    # Generation-aware tile budget (double-buffered logits + labels rows).
    try:
        vmem_cap = int(getattr(pltpu.get_tpu_info(), "vmem_capacity_bytes",
                               64 * 1024 * 1024))
    except Exception:
        vmem_cap = 64 * 1024 * 1024
    target_ws = min((2 * vmem_cap) // 5, 48 * 1024 * 1024)
    bytes_per_row = 2 * _LANES * (C * itemsize + 4)       # 2x = double buffering
    budget_rows = max(8, ((target_ws // bytes_per_row) // 8) * 8)

    rows = (HW + _LANES - 1) // _LANES
    padded = (HW % _LANES) != 0
    tile_rows = None
    num_tiles = 1
    if not padded:
        if rows <= budget_rows:
            tile_rows, num_tiles = rows, 1
        else:
            top = min(budget_rows, (rows // 8) * 8)
            for cand in range(top, 7, -8):
                if rows % cand == 0:
                    tile_rows, num_tiles = cand, rows // cand
                    break
            padded = tile_rows is None
    if padded:
        # Rare fallback (HW not a multiple of 128, or no multiple-of-8 divisor of
        # `rows` fits the budget): one XLA pad pass. Padded logits are 0 (finite,
        # no inf from exp) and padded labels never match a class, so the kernel
        # needs no masking.
        # TODO(synk): mask logits before exp in a ragged last tile instead of
        # paying this extra HBM pass over logits.
        tile_rows = min(budget_rows, ((rows + 7) // 8) * 8)
        num_tiles = (rows + tile_rows - 1) // tile_rows

    rows_pad = num_tiles * tile_rows
    hw_pad = rows_pad * _LANES

    logits = output.reshape(N, C, HW)          # free reshapes, no transpose
    labels = target.reshape(N, HW)
    if hw_pad != HW:
        logits = jnp.pad(logits, ((0, 0), (0, 0), (0, hw_pad - HW)))
        labels = jnp.pad(labels, ((0, 0), (0, hw_pad - HW)),
                         constant_values=_PAD_LABEL)
    logits = logits.reshape(N, C, rows_pad, _LANES)
    labels = labels.reshape(N, rows_pad, _LANES)

    # Inner row-chunking so softmax intermediates stay vreg-resident.
    if tile_rows % 8 != 0:
        chunk_rows = tile_rows
    else:
        chunk_rows = 8
        for cand in (64, 32, 16, 8):
            if tile_rows % cand == 0:
                chunk_rows = cand
                break
    acc_rows = 8 if chunk_rows % 8 == 0 else chunk_rows

    # With N == 1, split the pixel-tile axis so both v7x TensorCores get work.
    n_split = 2 if (N == 1 and num_tiles >= 2 and num_tiles % 2 == 0) else 1
    tiles_per_split = num_tiles // n_split

    block_bytes = tile_rows * _LANES * (C * itemsize + 4)
    vmem_limit = int(min(vmem_cap,
                         max(32 * 1024 * 1024, 2 * block_bytes + 8 * 1024 * 1024)))

    kernel = functools.partial(_dice_kernel, num_classes=C, tile_rows=tile_rows,
                               chunk_rows=chunk_rows, acc_rows=acc_rows)

    partials = pl.pallas_call(
        kernel,
        out_shape=jax.ShapeDtypeStruct((N, n_split, 2, _LANES), jnp.float32),
        grid_spec=pltpu.PrefetchScalarGridSpec(
            num_scalar_prefetch=1,
            grid=(N, n_split, tiles_per_split),
            in_specs=[
                pl.BlockSpec((1, C, tile_rows, _LANES),
                             lambda n, s, t, sc: (n, 0, s * tiles_per_split + t, 0)),
                pl.BlockSpec((1, tile_rows, _LANES),
                             lambda n, s, t, sc: (n, s * tiles_per_split + t, 0)),
            ],
            out_specs=pl.BlockSpec((1, 1, 2, _LANES),
                                   lambda n, s, t, sc: (n, s, 0, 0)),
            scratch_shapes=[pltpu.VMEM((2, acc_rows, _LANES), jnp.float32)],
        ),
        compiler_params=pltpu.CompilerParams(
            dimension_semantics=("parallel", "parallel", "arbitrary"),
            vmem_limit_bytes=vmem_limit,
        ),
    )(scalars, logits, labels)

    inter = jnp.sum(partials[:, :, 0, :])
    tsum = jnp.sum(partials[:, :, 1, :])
    # sum(softmax) over classes is exactly 1 per pixel -> analytic constant
    # (differs from the fp reference only by per-pixel rounding, ~1e-7 rel).
    osum = jnp.float32(N * HW)
    return 1.0 - (2.0 * inter + smooth) / (osum + tsum + smooth)


def _dice_loss_ref(output, target, smooth=1.0, ignore_index=255):
    """Pure-JAX reference mirroring the PyTorch forward."""
    target = target.astype(jnp.int32)
    tmin = jnp.min(target)
    tmax = jnp.max(target)
    in_range = (ignore_index >= tmin) & (ignore_index < tmax)
    has_ignore = jnp.sum(target == ignore_index) > 0
    do_replace = jnp.logical_and(jnp.logical_not(in_range), has_ignore)
    target = jnp.where(jnp.logical_and(do_replace, target == ignore_index), tmin, target)

    C = output.shape[1]
    one_hot = jax.nn.one_hot(target, C, axis=1, dtype=jnp.float32)  # (N, C, H, W)
    sm = jax.nn.softmax(output.astype(jnp.float32), axis=1)
    inter = jnp.sum(sm * one_hot)
    return 1.0 - (2.0 * inter + smooth) / (jnp.sum(sm) + jnp.sum(one_hot) + smooth)


if __name__ == "__main__":
    key = jax.random.PRNGKey(0)
    k1, k2 = jax.random.split(key)

    N, C, H, W = 2, 4, 16, 16
    logits = jax.random.normal(k1, (N, C, H, W), dtype=jnp.float32)
    labels = jax.random.randint(k2, (N, H, W), 0, C, dtype=jnp.int32)
    # sprinkle a few ignore_index pixels to exercise that path
    labels = labels.at[0, 0, 0].set(255).at[1, 3, 7].set(255)

    loss = jax.block_until_ready(dice_loss(logits, labels, smooth=1.0, ignore_index=255))
    ref = jax.block_until_ready(_dice_loss_ref(logits, labels, smooth=1.0, ignore_index=255))

    assert jnp.allclose(loss, ref, atol=1e-5, rtol=1e-5), (loss, ref)
    print("KERNEL_OK")
</pallas_src>

<mosaic_0001>
module attributes {stable_mosaic.version = 11 : i64} {
  func.func @_dice_kernel(%arg0: i32, %arg1: i32, %arg2: i32, %arg3: memref<3xi32, #tpu.memory_space<smem>>, %arg4: memref<1x4x2x128xf32, #tpu.memory_space<vmem>>, %arg5: memref<1x2x128xi32, #tpu.memory_space<vmem>>, %arg6: memref<1x1x2x128xf32, #tpu.memory_space<vmem>>, %arg7: memref<2x2x128xf32, #tpu.memory_space<vmem>>) attributes {dimension_semantics = [#tpu.dimension_semantics<parallel>, #tpu.dimension_semantics<parallel>, #tpu.dimension_semantics<arbitrary>], iteration_bounds = array<i64: 2, 1, 1>, scalar_prefetch = 1 : i64, scratch_operands = 1 : i64, tpu.core_type = #tpu.core_type<tc>, window_params = [{transform_indices = @transform_0, window_bounds = array<i64: 1, 4, 2, 128>}, {transform_indices = @transform_1, window_bounds = array<i64: 1, 2, 128>}, {transform_indices = @transform_2, window_bounds = array<i64: 1, 1, 2, 128>}]} {
    %c0_i32 = arith.constant 0 : i32
    %0 = arith.cmpi eq, %arg2, %c0_i32 : i32
    %1 = arith.extui %0 : i1 to i32
    %c0_i32_0 = arith.constant 0 : i32
    %2 = arith.cmpi ne, %1, %c0_i32_0 : i32
    scf.if %2 {
      %cst_53 = arith.constant 0.000000e+00 : f32
      %84 = vector.broadcast %cst_53 : f32 to vector<2x2x128xf32>
      %c0_54 = arith.constant 0 : index
      %c0_55 = arith.constant 0 : index
      %c0_56 = arith.constant 0 : index
      %85 = vector.load %arg7[%c0_54, %c0_55, %c0_56] : memref<2x2x128xf32, #tpu.memory_space<vmem>>, vector<2x2x128xf32>
      tpu.vector_store %arg7[%c0_54, %c0_55, %c0_56], %84 {strides = array<i32>} : memref<2x2x128xf32, #tpu.memory_space<vmem>>, vector<2x2x128xf32>,
    } else {
    }
    %c0 = arith.constant 0 : index
    %3 = memref.load %arg3[%c0] : memref<3xi32, #tpu.memory_space<smem>>
    %c1 = arith.constant 1 : index
    %4 = memref.load %arg3[%c1] : memref<3xi32, #tpu.memory_space<smem>>
    %c0_i32_1 = arith.constant 0 : i32
    %5 = arith.cmpi sgt, %4, %c0_i32_1 : i32
    %c2 = arith.constant 2 : index
    %6 = memref.load %arg3[%c2] : memref<3xi32, #tpu.memory_space<smem>>
    %c0_2 = arith.constant 0 : index
    %c0_3 = arith.constant 0 : index
    %c0_4 = arith.constant 0 : index
    %7 = vector.load %arg5[%c0_2, %c0_3, %c0_4] : memref<1x2x128xi32, #tpu.memory_space<vmem>>, vector<1x2x128xi32>
    %8 = vector.shape_cast %7 : vector<1x2x128xi32> to vector<2x128xi32>
    %9 = vector.broadcast %6 : i32 to vector<2x128xi32>
    %10 = arith.cmpi eq, %8, %9 : vector<2x128xi32>
    %11 = vector.broadcast %5 : i1 to vector<2x128xi1>
    %12 = arith.andi %11, %10 : vector<2x128xi1>
    %13 = vector.broadcast %3 : i32 to vector<2x128xi32>
    %14 = arith.select %12, %13, %8 : vector<2x128xi1>, vector<2x128xi32>
    %c0_5 = arith.constant 0 : index
    %c0_6 = arith.constant 0 : index
    %c0_7 = arith.constant 0 : index
    %c0_8 = arith.constant 0 : index
    %15 = vector.load %arg4[%c0_5, %c0_6, %c0_7, %c0_8] : memref<1x4x2x128xf32, #tpu.memory_space<vmem>>, vector<1x1x2x128xf32>
    %16 = vector.shape_cast %15 : vector<1x1x2x128xf32> to vector<2x128xf32>
    %c0_9 = arith.constant 0 : index
    %c1_10 = arith.constant 1 : index
    %c0_11 = arith.constant 0 : index
    %c0_12 = arith.constant 0 : index
    %17 = vector.load %arg4[%c0_9, %c1_10, %c0_11, %c0_12] : memref<1x4x2x128xf32, #tpu.memory_space<vmem>>, vector<1x1x2x128xf32>
    %18 = vector.shape_cast %17 : vector<1x1x2x128xf32> to vector<2x128xf32>
    %19 = arith.maximumf %16, %18 : vector<2x128xf32>
    %c0_13 = arith.constant 0 : index
    %c2_14 = arith.constant 2 : index
    %c0_15 = arith.constant 0 : index
    %c0_16 = arith.constant 0 : index
    %20 = vector.load %arg4[%c0_13, %c2_14, %c0_15, %c0_16] : memref<1x4x2x128xf32, #tpu.memory_space<vmem>>, vector<1x1x2x128xf32>
    %21 = vector.shape_cast %20 : vector<1x1x2x128xf32> to vector<2x128xf32>
    %22 = arith.maximumf %19, %21 : vector<2x128xf32>
    %c0_17 = arith.constant 0 : index
    %c3 = arith.constant 3 : index
    %c0_18 = arith.constant 0 : index
    %c0_19 = arith.constant 0 : index
    %23 = vector.load %arg4[%c0_17, %c3, %c0_18, %c0_19] : memref<1x4x2x128xf32, #tpu.memory_space<vmem>>, vector<1x1x2x128xf32>
    %24 = vector.shape_cast %23 : vector<1x1x2x128xf32> to vector<2x128xf32>
    %25 = arith.maximumf %22, %24 : vector<2x128xf32>
    %cst = arith.constant 0.000000e+00 : f32
    %26 = vector.broadcast %cst : f32 to vector<2x128xf32>
    %cst_20 = arith.constant 0.000000e+00 : f32
    %27 = vector.broadcast %cst_20 : f32 to vector<2x128xf32>
    %c0_21 = arith.constant 0 : index
    %c0_22 = arith.constant 0 : index
    %c0_23 = arith.constant 0 : index
    %c0_24 = arith.constant 0 : index
    %28 = vector.load %arg4[%c0_21, %c0_22, %c0_23, %c0_24] : memref<1x4x2x128xf32, #tpu.memory_space<vmem>>, vector<1x1x2x128xf32>
    %29 = vector.shape_cast %28 : vector<1x1x2x128xf32> to vector<2x128xf32>
    %30 = arith.subf %29, %25 : vector<2x128xf32>
    %31 = math.exp %30 : vector<2x128xf32>
    %32 = arith.addf %26, %31 : vector<2x128xf32>
    %c0_i32_25 = arith.constant 0 : i32
    %33 = vector.broadcast %c0_i32_25 : i32 to vector<2x128xi32>
    %34 = arith.cmpi eq, %14, %33 : vector<2x128xi32>
    %35 = arith.select %34, %31, %27 : vector<2x128xi1>, vector<2x128xf32>
    %c0_26 = arith.constant 0 : index
    %c1_27 = arith.constant 1 : index
    %c0_28 = arith.constant 0 : index
    %c0_29 = arith.constant 0 : index
    %36 = vector.load %arg4[%c0_26, %c1_27, %c0_28, %c0_29] : memref<1x4x2x128xf32, #tpu.memory_space<vmem>>, vector<1x1x2x128xf32>
    %37 = vector.shape_cast %36 : vector<1x1x2x128xf32> to vector<2x128xf32>
    %38 = arith.subf %37, %25 : vector<2x128xf32>
    %39 = math.exp %38 : vector<2x128xf32>
    %40 = arith.addf %32, %39 : vector<2x128xf32>
    %c1_i32 = arith.constant 1 : i32
    %41 = vector.broadcast %c1_i32 : i32 to vector<2x128xi32>
    %42 = arith.cmpi eq, %14, %41 : vector<2x128xi32>
    %43 = arith.select %42, %39, %35 : vector<2x128xi1>, vector<2x128xf32>
    %c0_30 = arith.constant 0 : index
    %c2_31 = arith.constant 2 : index
    %c0_32 = arith.constant 0 : index
    %c0_33 = arith.constant 0 : index
    %44 = vector.load %arg4[%c0_30, %c2_31, %c0_32, %c0_33] : memref<1x4x2x128xf32, #tpu.memory_space<vmem>>, vector<1x1x2x128xf32>
    %45 = vector.shape_cast %44 : vector<1x1x2x128xf32> to vector<2x128xf32>
    %46 = arith.subf %45, %25 : vector<2x128xf32>
    %47 = math.exp %46 : vector<2x128xf32>
    %48 = arith.addf %40, %47 : vector<2x128xf32>
    %c2_i32 = arith.constant 2 : i32
    %49 = vector.broadcast %c2_i32 : i32 to vector<2x128xi32>
    %50 = arith.cmpi eq, %14, %49 : vector<2x128xi32>
    %51 = arith.select %50, %47, %43 : vector<2x128xi1>, vector<2x128xf32>
    %c0_34 = arith.constant 0 : index
    %c3_35 = arith.constant 3 : index
    %c0_36 = arith.constant 0 : index
    %c0_37 = arith.constant 0 : index
    %52 = vector.load %arg4[%c0_34, %c3_35, %c0_36, %c0_37] : memref<1x4x2x128xf32, #tpu.memory_space<vmem>>, vector<1x1x2x128xf32>
    %53 = vector.shape_cast %52 : vector<1x1x2x128xf32> to vector<2x128xf32>
    %54 = arith.subf %53, %25 : vector<2x128xf32>
    %55 = math.exp %54 : vector<2x128xf32>
    %56 = arith.addf %48, %55 : vector<2x128xf32>
    %c3_i32 = arith.constant 3 : i32
    %57 = vector.broadcast %c3_i32 : i32 to vector<2x128xi32>
    %58 = arith.cmpi eq, %14, %57 : vector<2x128xi32>
    %59 = arith.select %58, %55, %51 : vector<2x128xi1>, vector<2x128xf32>
    %60 = tpu.reciprocal %56 : vector<2x128xf32> -> vector<2x128xf32>
    %61 = arith.mulf %59, %60 : vector<2x128xf32>
    %c0_i32_38 = arith.constant 0 : i32
    %62 = vector.broadcast %c0_i32_38 : i32 to vector<2x128xi32>
    %63 = arith.cmpi sge, %14, %62 : vector<2x128xi32>
    %c4_i32 = arith.constant 4 : i32
    %64 = vector.broadcast %c4_i32 : i32 to vector<2x128xi32>
    %65 = arith.cmpi slt, %14, %64 : vector<2x128xi32>
    %66 = arith.andi %63, %65 : vector<2x128xi1>
    %67 = arith.extui %66 : vector<2x128xi1> to vector<2x128xi32>
    %68 = arith.sitofp %67 : vector<2x128xi32> to vector<2x128xf32>
    %c0_39 = arith.constant 0 : index
    %c0_40 = arith.constant 0 : index
    %c0_41 = arith.constant 0 : index
    %69 = vector.load %arg7[%c0_39, %c0_40, %c0_41] : memref<2x2x128xf32, #tpu.memory_space<vmem>>, vector<1x2x128xf32>
    %70 = vector.shape_cast %69 : vector<1x2x128xf32> to vector<2x128xf32>
    %71 = arith.addf %70, %61 : vector<2x128xf32>
    %c0_42 = arith.constant 0 : index
    %c0_43 = arith.constant 0 : index
    %c0_44 = arith.constant 0 : index
    %72 = vector.load %arg7[%c0_42, %c0_43, %c0_44] : memref<2x2x128xf32, #tpu.memory_space<vmem>>, vector<1x2x128xf32>
    %73 = vector.shape_cast %72 : vector<1x2x128xf32> to vector<2x128xf32>
    %74 = vector.shape_cast %71 : vector<2x128xf32> to vector<1x2x128xf32>
    tpu.vector_store %arg7[%c0_42, %c0_43, %c0_44], %74 {strides = array<i32>} : memref<2x2x128xf32, #tpu.memory_space<vmem>>, vector<1x2x128xf32>,
    %c1_45 = arith.constant 1 : index
    %c0_46 = arith.constant 0 : index
    %c0_47 = arith.constant 0 : index
    %75 = vector.load %arg7[%c1_45, %c0_46, %c0_47] : memref<2x2x128xf32, #tpu.memory_space<vmem>>, vector<1x2x128xf32>
    %76 = vector.shape_cast %75 : vector<1x2x128xf32> to vector<2x128xf32>
    %77 = arith.addf %76, %68 : vector<2x128xf32>
    %c1_48 = arith.constant 1 : index
    %c0_49 = arith.constant 0 : index
    %c0_50 = arith.constant 0 : index
    %78 = vector.load %arg7[%c1_48, %c0_49, %c0_50] : memref<2x2x128xf32, #tpu.memory_space<vmem>>, vector<1x2x128xf32>
    %79 = vector.shape_cast %78 : vector<1x2x128xf32> to vector<2x128xf32>
    %80 = vector.shape_cast %77 : vector<2x128xf32> to vector<1x2x128xf32>
    tpu.vector_store %arg7[%c1_48, %c0_49, %c0_50], %80 {strides = array<i32>} : memref<2x2x128xf32, #tpu.memory_space<vmem>>, vector<1x2x128xf32>,
    %c0_i32_51 = arith.constant 0 : i32
    %81 = arith.cmpi eq, %arg2, %c0_i32_51 : i32
    %82 = arith.extui %81 : i1 to i32
    %c0_i32_52 = arith.constant 0 : i32
    %83 = arith.cmpi ne, %82, %c0_i32_52 : i32
    scf.if %83 {
      %c0_53 = arith.constant 0 : index
      %c0_54 = arith.constant 0 : index
      %c0_55 = arith.constant 0 : index
      %84 = vector.load %arg7[%c0_53, %c0_54, %c0_55] : memref<2x2x128xf32, #tpu.memory_space<vmem>>, vector<2x2x128xf32>
      %cst_56 = arith.constant dense<0.000000e+00> : vector<2x128xf32>
      %85 = vector.multi_reduction <add>, %84, %cst_56 [1] : vector<2x2x128xf32> to vector<2x128xf32>
      %86 = vector.shape_cast %85 : vector<2x128xf32> to vector<1x1x2x128xf32>
      %c0_57 = arith.constant 0 : index
      %c0_58 = arith.constant 0 : index
      %c0_59 = arith.constant 0 : index
      %c0_60 = arith.constant 0 : index
      %87 = vector.load %arg6[%c0_57, %c0_58, %c0_59, %c0_60] : memref<1x1x2x128xf32, #tpu.memory_space<vmem>>, vector<1x1x2x128xf32>
      tpu.vector_store %arg6[%c0_57, %c0_58, %c0_59, %c0_60], %86 {strides = array<i32>} : memref<1x1x2x128xf32, #tpu.memory_space<vmem>>, vector<1x1x2x128xf32>,
    } else {
    }
    return
  }
  func.func @transform_0(%arg0: i32, %arg1: i32, %arg2: i32, %arg3: memref<3xi32, #tpu.memory_space<smem>>) -> (i32, i32, i32, i32) {
    %c1_i32 = arith.constant 1 : i32
    %0 = arith.muli %arg1, %c1_i32 : i32
    %1 = arith.addi %0, %arg2 : i32
    %c0_i32 = arith.constant 0 : i32
    %c0_i32_0 = arith.constant 0 : i32
    %c0_i32_1 = arith.constant 0 : i32
    return %arg0, %c0_i32, %1, %c0_i32_0 : i32, i32, i32, i32
  }
  func.func @transform_1(%arg0: i32, %arg1: i32, %arg2: i32, %arg3: memref<3xi32, #tpu.memory_space<smem>>) -> (i32, i32, i32) {
    %c1_i32 = arith.constant 1 : i32
    %0 = arith.muli %arg1, %c1_i32 : i32
    %1 = arith.addi %0, %arg2 : i32
    %c0_i32 = arith.constant 0 : i32
    %c0_i32_0 = arith.constant 0 : i32
    return %arg0, %1, %c0_i32 : i32, i32, i32
  }
  func.func @transform_2(%arg0: i32, %arg1: i32, %arg2: i32, %arg3: memref<3xi32, #tpu.memory_space<smem>>) -> (i32, i32, i32, i32) {
    %c0_i32 = arith.constant 0 : i32
    %c0_i32_0 = arith.constant 0 : i32
    %c0_i32_1 = arith.constant 0 : i32
    return %arg0, %arg1, %c0_i32, %c0_i32_0 : i32, i32, i32, i32
  }
}

</mosaic_0001>

<llo_original>
// kernel: tpu_custom_call.1
$region0: #{tpu_custom_call.1}
  #allocation0 [shape = 'u32[]', space=smem, size = 0x4, offset = 0x4, fixed_abs, tag = 'smem constant byte address 0x4 - core index']
  #allocation1 [shape = 'u32[144,128]{1,0:T(1,128)}', space=vmem, size = 0x12000, scoped, tag = 'internal scratch']
  #allocation2 [shape = 'f32[2,2,128]{2,1,0:T(2,128)}', space=vmem, size = 0x800, scoped, tag = 'scratch operand']
  #allocation3 [shape = 's32[1]{0}', space=sflag, size = 0x4, scoped, tag = 'scoped memory for tpu_custom_call.1']
  #allocation4 [shape = 'u8[512]{0}', space=smem, size = 0x200, scoped, tag = 'prefetched SMEM operand 0']
  %s0 = inlined_call_operand.hbm [shape: s32[3], index: 0, kind: input, shape index: {}]
  %s1 = inlined_call_operand.hbm [shape: f32[2,4,2,128], index: 1, kind: input, shape index: {}]
  %s2 = inlined_call_operand.vmem [shape: s32[2,2,128], index: 2, kind: input, shape index: {}]
  %s3 = inlined_call_operand.hbm [shape: f32[2,1,2,128], index: 3, kind: output, shape index: {}]
  %s4 = sld [smem:[#allocation0]]
  $region53: #{tpu_custom_call.1} parent=0
    _
  %s6 = ssub.s32 1, %s4
  %s7 = scalar_select 0, %s6, %s4
  %9 = dma.hbm_to_smem %s0, 16, [#allocation4], [#allocation3]
  %10 = dma.done [#allocation3], 16
  %11 = sfence
  $region1: #{tpu_custom_call.1} parent=0
    #allocation5 [shape = 'u8[8192]{0}', space=vmem, size = 0x2000, scoped, tag = 'input window, operand 1']
    #allocation6 [shape = 's32[2]{0}', space=sflag, size = 0x8, scoped, tag = 'scoped memory for tpu_custom_call.1']
    #allocation7 [shape = 's32[2]{0}', space=sflag, size = 0x8, scoped, tag = 'scoped memory for tpu_custom_call.1']
    #allocation8 [shape = 'u8[2048]{0}', space=vmem, size = 0x800, scoped, tag = 'output window, operand 0']
    %12 = vsyncpa [#allocation6], 0
    %s13 = scalar_lea.sflag [#allocation6], 1
    %14 = vsyncpa %s13, 0
    %15 = vsyncpa [#allocation7], 0
    %s16 = scalar_lea.sflag [#allocation7], 1
    %17 = vsyncpa %s16, 0
    loop: start=0, step=1, limit=4
    $region2: #{tpu_custom_call.1} parent=1 // loop_pre_header
      _
    $region3: #{tpu_custom_call.1} parent=1 // loop_header
      %s19 = sphi 0, %s23
      %p20 = scmp.ge.s32.totalorder %s19, 4
      %s26 = sphi 0, %s45
      %s27 = sphi 0, %s41
      %s28 = sphi 0, %s37
      %s29 = sphi 0, %s26
      %s30 = sphi 0, %s27
      %s31 = sphi 0, %s28
      %s32 = sphi 0, %s29
      %s33 = sphi 0, %s30
      %s34 = sphi 0, %s31
      %s52 = sphi 0, %s54
      %s55 = sphi 0, %s52
      %s56 = sphi 0, %s55
      %s72 = sphi 0, %s56
      %s82 = sphi 0, %s84
      %s85 = sphi 0, %s82
      %s86 = sphi 0, %s85
      %s102 = sphi 0, %s86
      %s110 = sphi 0, %s112
      %s113 = sphi 0, %s110
      %s114 = sphi 0, %s113
      %s130 = sphi 0, %s114
    $region4: #{tpu_custom_call.1} parent=1 // loop_header_branch
      %22 = sbr.rel (%p20) target = $region8
    $region5: #{tpu_custom_call.1} parent=1 // loop_body
      %s24 = ssub.s32 %s19, 1
      %s25 = ssub.s32 %s19, 2
      %s35 = sadd.s32 1, %s28
      %p36 = scmp.ge.s32.totalorder %s35, 1
      %s37 = scalar_select %p36, 0, %s35
      %s38 = sadd.s32 1, %s27
      %s39 = scalar_select %p36, %s38, %s27
      %p40 = scmp.ge.s32.totalorder %s39, 1
      %s41 = scalar_select %p40, 0, %s39
      %s42 = sadd.s32 1, %s26
      %s43 = scalar_select %p40, %s42, %s26
      %p44 = scmp.ge.s32.totalorder %s43, 2
      %s45 = scalar_select %p44, 0, %s43
      %s46 = sadd.s32 %s27, %s28
      %s47 = sadd.s32 %s41, %s37
      %s48 = ssub.s32 %s26, %s45
      %s49 = ssub.s32 %s46, %s47
      %s50 = sor.u32 %s48, %s49
      %p51 = scmp.eq.s32.totalorder %s50, 0
      %s53 = sadd.s32 %s52, 1
      %s54 = scalar_select %p51, %s52, %s53
      %p57 = pneg %p51
      %p58 = scmp.eq.s32.totalorder %s19, 1
      %p59 = por %p57, %p58
      %p60 = scmp.ne.s32.totalorder %s52, %s55
      %p61 = scmp.eq.s32.totalorder %s19, 0
      %p62 = por %p60, %p61
      %p63 = scmp.ne.s32.totalorder %s52, %s55
      %p64 = scmp.eq.s32.totalorder %s24, 1
      %p65 = por %p63, %p64
      %p66 = scmp.ne.s32.totalorder %s55, %s56
      %p67 = scmp.eq.s32.totalorder %s24, 0
      %p68 = por %p66, %p67
      %p69 = scmp.ne.s32.totalorder %s55, %s56
      %p70 = scmp.eq.s32.totalorder %s25, 1
      %p71 = por %p69, %p70
      %p73 = scmp.ne.s32.totalorder %s56, %s72
      %p74 = scmp.eq.s32.totalorder %s25, 0
      %p75 = por %p73, %p74
      %s76 = sadd.s32 %s27, %s28
      %s77 = sadd.s32 %s41, %s37
      %s78 = ssub.s32 %s26, %s45
      %s79 = ssub.s32 %s76, %s77
      %s80 = sor.u32 %s78, %s79
      %p81 = scmp.eq.s32.totalorder %s80, 0
      %s83 = sadd.s32 %s82, 1
      %s84 = scalar_select %p81, %s82, %s83
      %p87 = pneg %p81
      %p88 = scmp.eq.s32.totalorder %s19, 1
      %p89 = por %p87, %p88
      %p90 = scmp.ne.s32.totalorder %s82, %s85
      %p91 = scmp.eq.s32.totalorder %s19, 0
      %p92 = por %p90, %p91
      %p93 = scmp.ne.s32.totalorder %s82, %s85
      %p94 = scmp.eq.s32.totalorder %s24, 1
      %p95 = por %p93, %p94
      %p96 = scmp.ne.s32.totalorder %s85, %s86
      %p97 = scmp.eq.s32.totalorder %s24, 0
      %p98 = por %p96, %p97
      %p99 = scmp.ne.s32.totalorder %s85, %s86
      %p100 = scmp.eq.s32.totalorder %s25, 1
      %p101 = por %p99, %p100
      %p103 = scmp.ne.s32.totalorder %s86, %s102
      %p104 = scmp.eq.s32.totalorder %s25, 0
      %p105 = por %p103, %p104
      %s106 = ssub.s32 %s26, %s45
      %s107 = ssub.s32 %s27, %s41
      %s108 = sor.u32 %s106, %s107
      %p109 = scmp.eq.s32.totalorder %s108, 0
      %s111 = sadd.s32 %s110, 1
      %s112 = scalar_select %p109, %s110, %s111
      %p115 = pneg %p109
      %p116 = scmp.eq.s32.totalorder %s19, 1
      %p117 = por %p115, %p116
      %p118 = scmp.ne.s32.totalorder %s110, %s113
      %p119 = scmp.eq.s32.totalorder %s19, 0
      %p120 = por %p118, %p119
      %p121 = scmp.ne.s32.totalorder %s110, %s113
      %p122 = scmp.eq.s32.totalorder %s24, 1
      %p123 = por %p121, %p122
      %p124 = scmp.ne.s32.totalorder %s113, %s114
      %p125 = scmp.eq.s32.totalorder %s24, 0
      %p126 = por %p124, %p125
      %p127 = scmp.ne.s32.totalorder %s113, %s114
      %p128 = scmp.eq.s32.totalorder %s25, 1
      %p129 = por %p127, %p128
      %p131 = scmp.ne.s32.totalorder %s114, %s130
      %p132 = scmp.eq.s32.totalorder %s25, 0
      %p133 = por %p131, %p132
      %p134 = scmp.le.s32.totalorder 1, %s19
      %p135 = scmp.lt.s32.totalorder %s19, 3
      %p136 = pnand %p134, %p135
      %p137 = pneg %p136
      // Predicated region
      $region9: #{tpu_custom_call.1} parent=5 // pred_check
        _
      $region10: #{tpu_custom_call.1} parent=5 // pred_check_branch
        %139 = sbr.rel (%p136) target = $region12
      $region11: #{tpu_custom_call.1} parent=5 // pred_region
        %s140 = ssub.s32 %s19, 1
      $region12: #{tpu_custom_call.1} parent=5 // pred_fallthru
        _
      %p141 = scmp.lt.s32.totalorder %s19, 2
      // Predicated region
      $region13: #{tpu_custom_call.1} parent=5 // pred_check
        %p142 = pneg %p141
      $region14: #{tpu_custom_call.1} parent=5 // pred_check_branch
        %144 = sbr.rel (%p142) target = $region16
      $region15: #{tpu_custom_call.1} parent=5 // pred_region
        // Predicated region
        $region17: #{tpu_custom_call.1} parent=15 // pred_check
          %p145 = pneg %p62
        $region18: #{tpu_custom_call.1} parent=15 // pred_check_branch
          %147 = sbr.rel (%p145) target = $region20
        $region19: #{tpu_custom_call.1} parent=15 // pred_region
          %s148 = sand.u32 %s52, 1
          %s149 = scalar_lea.sflag [#allocation6], %s148
          %s150 = sand.u32 %s52, 1
          %s151 = smul.addr %s150, 8
          %s152 = scalar_lea.vmem [#allocation5], %s151
          %s153 = sadd.s32 %s27, %s28
          %s155 = ssub.s32 128, 128
          %156 = vsyncadd %s149, %s155
          %s157 = smul.addr %s26, 4
          %s158 = sadd.s32 %s153, %s157
          %s159 = smul.addr %s158, 32
          %s160 = scalar_lea.hbm %s1, %s159
          %s161 = sshll.u32 %s152, 4
          %s162 = int_to_ptr.vmem [resolvable:$true] %s161
          %167 = dma.hbm_to_vmem [thread:$0]  %s160, 128, %s162, %s149, 32, 32, 2
        $region20: #{tpu_custom_call.1} parent=15 // pred_fallthru
          _
        // Predicated region
        $region21: #{tpu_custom_call.1} parent=15 // pred_check
          %p168 = pneg %p92
        $region22: #{tpu_custom_call.1} parent=15 // pred_check_branch
          %170 = sbr.rel (%p168) target = $region24
        $region23: #{tpu_custom_call.1} parent=15 // pred_region
          %s171 = sadd.s32 %s27, %s28
          %p172 = scmp.lt.s32.totalorder %s26, 1
          %s173 = scalar_select %p172, %s26, 1
          %p174 = scmp.lt.s32.totalorder %s171, 0
          %s175 = scalar_select %p174, %s171, 0
          %s176 = sadd.s32 %s175, %s173
          %s177 = smul.addr %s176, 2
          %s178 = scalar_lea.vmem %s2, %s177
          %s179 = sadd.s32 %s27, %s28
        $region24: #{tpu_custom_call.1} parent=15 // pred_fallthru
          _
      $region16: #{tpu_custom_call.1} parent=5 // pred_fallthru
        _
      %p180 = scmp.le.s32.totalorder 1, %s19
      %p181 = scmp.lt.s32.totalorder %s19, 3
      %p182 = pnand %p180, %p181
      %p183 = pneg %p182
      // Predicated region
      $region25: #{tpu_custom_call.1} parent=5 // pred_check
        _
      $region26: #{tpu_custom_call.1} parent=5 // pred_check_branch
        %185 = sbr.rel (%p182) target = $region28
      $region27: #{tpu_custom_call.1} parent=5 // pred_region
        %s186 = ssub.s32 %s19, 1
        %s187 = sand.u32 %s55, 1
        %s188 = scalar_lea.sflag [#allocation6], %s187
        %s189 = sand.u32 %s55, 1
        %s190 = smul.addr %s189, 8
        %s191 = scalar_lea.vmem [#allocation5], %s190
        // Predicated region
        $region29: #{tpu_custom_call.1} parent=27 // pred_check
          %p192 = pneg %p68
        $region30: #{tpu_custom_call.1} parent=27 // pred_check_branch
          %194 = sbr.rel (%p192) target = $region32
        $region31: #{tpu_custom_call.1} parent=27 // pred_region
          %195 = dma.done %s188, 128
        $region32: #{tpu_custom_call.1} parent=27 // pred_fallthru
          _
        %s196 = sand.u32 %s55, 1
        %s197 = scalar_lea.sflag [#allocation6], %s196
        %s198 = sand.u32 %s55, 1
        %s199 = smul.addr %s198, 8
        %s200 = scalar_lea.vmem [#allocation5], %s199
        %p201 = pneg %p68
        %p202 = pneg %p65
        %s203 = sadd.s32 %s30, %s31
        %p204 = scmp.lt.s32.totalorder %s29, 1
        %s205 = scalar_select %p204, %s29, 1
        %p206 = scmp.lt.s32.totalorder %s203, 0
        %s207 = scalar_select %p206, %s203, 0
        %s208 = sadd.s32 %s207, %s205
        %s209 = smul.addr %s208, 2
        %s210 = scalar_lea.vmem %s2, %s209
        %p211 = pneg %p98
        %p212 = pneg %p95
        %p213 = pneg %p126
        %p214 = pneg %p123
        %s215 = sand.u32 %s113, 1
        %s216 = scalar_lea.sflag [#allocation7], %s215
        %s217 = sand.u32 %s113, 1
        %s218 = smul.addr %s217, 2
        %s219 = scalar_lea.vmem [#allocation8], %s218
        %s220 = sadd.s32 %s30, %s31
        %s221 = sadd.s32 %s30, %s31
        %p222 = scmp.lt.s32.totalorder %s29, 1
        %s223 = scalar_select %p222, %s29, 1
        %p224 = scmp.lt.s32.totalorder %s221, 0
        %s225 = scalar_select %p224, %s221, 0
        %s226 = sadd.s32 %s225, %s223
        %s227 = smul.addr %s226, 2
        %s228 = scalar_lea.vmem %s2, %s227
        %s229 = sadd.s32 %s30, %s31
        %p230 = scmp.eq.s32.totalorder %s31, 0
        // Predicated region
        $region33: #{tpu_custom_call.1} parent=27 // pred_check
          %p231 = pneg %p230
        $region34: #{tpu_custom_call.1} parent=27 // pred_check_branch
          %233 = sbr.rel (%p231) target = $region36
        $region35: #{tpu_custom_call.1} parent=27 // pred_region
          %234 = vst [vmem:[#allocation2] sm:$0x3] 0.0
          %235 = vst [vmem:[#allocation2 + $0x2] sm:$0x3] 0.0
        $region36: #{tpu_custom_call.1} parent=27 // pred_fallthru
          _
        %s236 = sld [smem:[#allocation4]]
        %s237 = sld [smem:[#allocation4 + $0x1]]
        %p238 = scmp.gt.s32.totalorder %s237, 0
        %s239 = sld [smem:[#allocation4 + $0x2]]
        %v240 = vld [vmem:[%s228] sm:$0x3]
        %v241 = vstv %s239
        %vm242 = vcmp.eq.s32.totalorder %v240, %v241
        %s243 = scalar_select %p238, 1, 0
        %v244 = vstv %s243
        %vm245 = vcmp.eq.s32.totalorder %v244, 1
        %vm246 = vmand %vm245, %vm242
        %v247 = vstv %s236
        %v248 = vsel %vm246, %v247, %v240
        %v249 = vld [vmem:[%s191] sm:$0x3]
        %s250 = scalar_lea.vmem %s191, 2 [#allocation5]
        %v251 = vld [vmem:[%s250] sm:$0x3]
        %v252 = vmax.f32 %v249, %v251
        %s253 = scalar_lea.vmem %s191, 4 [#allocation5]
        %v254 = vld [vmem:[%s253] sm:$0x3]
        %v255 = vmax.f32 %v252, %v254
        %s256 = scalar_lea.vmem %s191, 6 [#allocation5]
        %v257 = vld [vmem:[%s256] sm:$0x3]
        %v258 = vmax.f32 %v255, %v257
        %v259 = vsub.f32 %v249, %v258
        %v260 = vmul.f32 %v259, 1.442695
        %v261 = vpow.pop %v260
        %v262 = vadd.f32 %v261, 0.0
        %vm263 = vcmp.eq.s32.totalorder %v248, 0
        %v264 = vsel %vm263, %v261, 0.0
        %v265 = vsub.f32 %v251, %v258
        %v266 = vmul.f32 %v265, 1.442695
        %v267 = vpow.pop %v266
        %v268 = vadd.f32 %v262, %v267
        %vm269 = vcmp.eq.s32.totalorder %v248, 1
        %v270 = vsel %vm269, %v267, %v264
        %v271 = vsub.f32 %v254, %v258
        %v272 = vmul.f32 %v271, 1.442695
        %v273 = vpow.pop %v272
        %v274 = vadd.f32 %v268, %v273
        %vm275 = vcmp.eq.s32.totalorder %v248, 2
        %v276 = vsel %vm275, %v273, %v270
        %v277 = vsub.f32 %v257, %v258
        %v278 = vmul.f32 %v277, 1.442695
        %v279 = vpow.pop %v278
        %v280 = vadd.f32 %v274, %v279
        %vm281 = vcmp.eq.s32.totalorder %v248, 3
        %v282 = vsel %vm281, %v279, %v276
        %v283 = vrcp.pop %v280
        %v284 = vmul.f32 %v282, %v283
        %vm285 = vcmp.ge.s32.totalorder %v248, 0
        %vm286 = vcmp.lt.s32.totalorder %v248, 4
        %vm287 = vmand %vm285, %vm286
        %v288 = vsel %vm287, 1, 0
        %v289 = vcvt.s32.f32 %v288
        %v290 = vld [vmem:[#allocation2] sm:$0x3]
        %v291 = vadd.f32 %v290, %v284
        %292 = vst [vmem:[#allocation2] sm:$0x3] %v291
        %s293 = scalar_lea.vmem [#allocation2], 2
        %v294 = vld [vmem:[%s293] sm:$0x3]
        %v295 = vadd.f32 %v294, %v289
        %296 = vst [vmem:[%s293] sm:$0x3] %v295
        // Predicated region
        $region37: #{tpu_custom_call.1} parent=27 // pred_check
          %p297 = pneg %p230
        $region38: #{tpu_custom_call.1} parent=27 // pred_check_branch
          %299 = sbr.rel (%p297) target = $region40
        $region39: #{tpu_custom_call.1} parent=27 // pred_region
          %v300 = vld [vmem:[#allocation2] sm:$0x3]
          %v301 = vld [vmem:[#allocation2 + $0x2] sm:$0x3]
          %vm302 = vcmask 1041408
          %v303 = vsel %vm302, %v300, 0.0
          %v304 = vrot.slane %v303, 4
          %v305 = vadd.f32 %v303, %v304
          %v306 = vrot.slane %v305, 2
          %v307 = vadd.f32 %v305, %v306
          %v308 = vrot.slane %v307, 1
          %v309 = vadd.f32 %v307, %v308
          %v310 = vsel %vm302, %v301, 0.0
          %v311 = vrot.slane %v310, 4
          %v312 = vadd.f32 %v310, %v311
          %v313 = vrot.slane %v312, 2
          %v314 = vadd.f32 %v312, %v313
          %v315 = vrot.slane %v314, 1
          %v316 = vadd.f32 %v314, %v315
          %vm319 = vcmask 1041409
          %v320 = vsel %vm319, %v316, %v309
          %322 = vst [vmem:[%s219] sm:$0x3] %v320
        $region40: #{tpu_custom_call.1} parent=27 // pred_fallthru
          _
        %s323 = sand.u32 %s113, 1
        %s324 = scalar_lea.sflag [#allocation7], %s323
        %s325 = sand.u32 %s113, 1
        %s326 = smul.addr %s325, 2
        %s327 = scalar_lea.vmem [#allocation8], %s326
        // Predicated region
        $region41: #{tpu_custom_call.1} parent=27 // pred_check
          %p328 = pneg %p123
        $region42: #{tpu_custom_call.1} parent=27 // pred_check_branch
          %330 = sbr.rel (%p328) target = $region44
        $region43: #{tpu_custom_call.1} parent=27 // pred_region
          %s332 = ssub.s32 32, 32
          %333 = vsyncadd %s324, %s332
          %s334 = sadd.s32 %s30, %s29
          %s335 = smul.addr %s334, 32
          %s336 = scalar_lea.hbm %s3, %s335
          %s338 = sshll.u32 %s327, 4
          %s339 = int_to_ptr.vmem [resolvable:$true] %s338
          %341 = dma.vmem_to_hbm [thread:$0]  %s339, 32, %s336, %s324
        $region44: #{tpu_custom_call.1} parent=27 // pred_fallthru
          _
      $region28: #{tpu_custom_call.1} parent=5 // pred_fallthru
        _
      %p342 = scmp.le.s32.totalorder 2, %s19
      // Predicated region
      $region45: #{tpu_custom_call.1} parent=5 // pred_check
        %p343 = pneg %p342
      $region46: #{tpu_custom_call.1} parent=5 // pred_check_branch
        %345 = sbr.rel (%p343) target = $region48
      $region47: #{tpu_custom_call.1} parent=5 // pred_region
        %s346 = ssub.s32 %s19, 2
        // Predicated region
        $region49: #{tpu_custom_call.1} parent=47 // pred_check
          %p347 = pneg %p129
        $region50: #{tpu_custom_call.1} parent=47 // pred_check_branch
          %349 = sbr.rel (%p347) target = $region52
        $region51: #{tpu_custom_call.1} parent=47 // pred_region
          %s350 = sand.u32 %s114, 1
          %s351 = scalar_lea.sflag [#allocation7], %s350
          %s352 = sand.u32 %s114, 1
          %s353 = smul.addr %s352, 2
          %s354 = scalar_lea.vmem [#allocation8], %s353
          %355 = dma.done %s351, 32
        $region52: #{tpu_custom_call.1} parent=47 // pred_fallthru
          _
      $region48: #{tpu_custom_call.1} parent=5 // pred_fallthru
        _
    $region6: #{tpu_custom_call.1} parent=1 // loop_footer
      %s23 = sadd.s32 1, %s19
    $region7: #{tpu_custom_call.1} parent=1 // loop_footer_branch
      %18 = sbr.rel target = $region3
    $region8: #{tpu_custom_call.1} parent=1 // loop_exit
      _
    %356 = vsyncpa [#allocation6], 1
    %s357 = scalar_lea.sflag [#allocation6], 1
    %358 = vsyncpa %s357, 1
    %359 = vsyncpa [#allocation7], 1
    %s360 = scalar_lea.sflag [#allocation7], 1
    %361 = vsyncpa %s360, 1

</llo_original>
